<compile_context>
chip_gen: v7x
topology: tpu7x:2x2x1
jax: 0.10.0
libtpu: 0.0.40
codegen_flags: <defaults>
</compile_context>

<pallas_src>
import jax
import jax.numpy as jnp
from jax import lax
from jax.experimental import pallas as pl
from jax.experimental.pallas import tpu as pltpu


def _round_up(x: int, m: int) -> int:
    return ((x + m - 1) // m) * m


def nbow_kernel(ids_ref, emb_ref, wt_ref, b_ref, out_ref):
    """One grid step: TB examples -> one-hot counts -> two MXU matmuls."""
    ids = ids_ref[...]                         # (TB, S) int32
    tb, s = ids.shape
    v = emb_ref.shape[0]

    # Mean-pool weights via token counts: weights[b, v] = #(ids[b, :] == v) / S.
    # Built on the VPU (compare + sublane reduce); no sequential gather loop.
    iota_v = lax.broadcasted_iota(jnp.int32, (tb, s, v), 2)
    one_hot = (ids[:, :, None] == iota_v).astype(jnp.float32)      # (TB, S, V)
    weights = jnp.sum(one_hot, axis=1) * (1.0 / s)                 # (TB, V)

    # Pooling and linear layer both on the MXU.
    pooled = jnp.dot(weights, emb_ref[...],
                     preferred_element_type=jnp.float32)           # (TB, E)
    logits = jnp.dot(pooled, wt_ref[...],
                     preferred_element_type=jnp.float32) + b_ref[...]
    out_ref[...] = logits.astype(out_ref.dtype)                    # (TB, O_pad)


def nbow_forward(ids, emb_weight, fc_weight, fc_bias, *, batch_tile=128):
    """ids: [B, S] int; emb_weight: [V, E]; fc_weight: [O, E]; fc_bias: [O]."""
    B, S = ids.shape
    V, E = emb_weight.shape
    O = fc_weight.shape[0]

    # Lane-dense classifier: pad O up to a multiple of 128 with zeros.
    O_pad = max(128, _round_up(O, 128))
    wt = jnp.zeros((E, O_pad), emb_weight.dtype).at[:, :O].set(fc_weight.T)
    b2 = jnp.zeros((1, O_pad), emb_weight.dtype).at[:, :O].set(fc_bias[None, :])

    # Batch tiling: TB rows per grid step (multiple of 8 for sublane tiling).
    TB = min(batch_tile, _round_up(B, 8))
    B_pad = _round_up(B, TB)
    ids_p = jnp.zeros((B_pad, S), jnp.int32).at[:B, :].set(ids.astype(jnp.int32))

    # NOTE: embedding table is kept fully resident in VMEM; for very large
    # vocabularies swap the counts-matmul for a gather/DMA path instead.
    out = pl.pallas_call(
        nbow_kernel,
        out_shape=jax.ShapeDtypeStruct((B_pad, O_pad), jnp.float32),
        grid_spec=pltpu.PrefetchScalarGridSpec(
            num_scalar_prefetch=0,
            grid=(B_pad // TB,),
            in_specs=[
                pl.BlockSpec((TB, S), lambda i: (i, 0)),      # ids tile
                pl.BlockSpec((V, E), lambda i: (0, 0)),       # full emb table
                pl.BlockSpec((E, O_pad), lambda i: (0, 0)),   # padded W^T
                pl.BlockSpec((1, O_pad), lambda i: (0, 0)),   # padded bias
            ],
            out_specs=pl.BlockSpec((TB, O_pad), lambda i: (i, 0)),
        ),
        compiler_params=pltpu.CompilerParams(
            dimension_semantics=("parallel",),     # batch rows are independent
            vmem_limit_bytes=64 * 1024 * 1024),
    )(ids_p, emb_weight, wt, b2)

    return out[:B, :O]


if __name__ == "__main__":
    # Small, deterministic synthetic setup consistent with the module.
    vocab_size = 64
    embedding_dim = 128
    output_dim = 8
    pad_index = 0
    batch, seq_len = 2, 8

    key = jax.random.PRNGKey(0)
    k_ids, k_emb, k_w, k_b = jax.random.split(key, 4)

    ids = jax.random.randint(k_ids, (batch, seq_len), 0, vocab_size,
                             dtype=jnp.int32)

    emb_weight = jax.random.normal(k_emb, (vocab_size, embedding_dim),
                                   dtype=jnp.float32)
    # nn.Embedding(padding_idx=pad_index) zeros the pad row at init.
    emb_weight = emb_weight.at[pad_index].set(0.0)

    fc_weight = 0.05 * jax.random.normal(k_w, (output_dim, embedding_dim),
                                         dtype=jnp.float32)
    fc_bias = 0.05 * jax.random.normal(k_b, (output_dim,), dtype=jnp.float32)

    out = nbow_forward(ids, emb_weight, fc_weight, fc_bias)
    out = jax.block_until_ready(out)

    # Pure-JAX reference for correctness.
    embedded = jnp.take(emb_weight, ids, axis=0)          # [B, S, E]
    pooled = embedded.mean(axis=1)                        # [B, E]
    ref = pooled @ fc_weight.T + fc_bias                  # [B, O]
    assert out.shape == (batch, output_dim)
    assert jnp.allclose(out, ref, atol=1e-4, rtol=1e-4), "mismatch vs reference"

    print("KERNEL_OK")
</pallas_src>

<mosaic_0001>
module attributes {stable_mosaic.version = 11 : i64} {
  func.func @nbow_kernel(%arg0: i32, %arg1: memref<8x8xi32, #tpu.memory_space<vmem>>, %arg2: memref<64x128xf32, #tpu.memory_space<vmem>>, %arg3: memref<128x128xf32, #tpu.memory_space<vmem>>, %arg4: memref<1x128xf32, #tpu.memory_space<vmem>>, %arg5: memref<8x128xf32, #tpu.memory_space<vmem>>) attributes {dimension_semantics = [#tpu.dimension_semantics<parallel>], iteration_bounds = array<i64: 1>, scalar_prefetch = 0 : i64, scratch_operands = 0 : i64, tpu.core_type = #tpu.core_type<tc>, window_params = [{transform_indices = @transform_0, window_bounds = array<i64: 8, 8>}, {pipeline_mode = #tpu.pipeline_mode<synchronous>, transform_indices = @transform_1, window_bounds = array<i64: 64, 128>}, {pipeline_mode = #tpu.pipeline_mode<synchronous>, transform_indices = @transform_2, window_bounds = array<i64: 128, 128>}, {pipeline_mode = #tpu.pipeline_mode<synchronous>, transform_indices = @transform_3, window_bounds = array<i64: 1, 128>}, {transform_indices = @transform_4, window_bounds = array<i64: 8, 128>}]} {
    %c0 = arith.constant 0 : index
    %c0_0 = arith.constant 0 : index
    %0 = vector.load %arg1[%c0, %c0_0] : memref<8x8xi32, #tpu.memory_space<vmem>>, vector<8x8xi32>
    %1 = tpu.iota {dimensions = array<i32: 2>} : vector<8x8x64xi32>
    %2 = vector.shape_cast %0 : vector<8x8xi32> to vector<8x8x1xi32>
    %3 = vector.broadcast %2 : vector<8x8x1xi32> to vector<8x8x64xi32>
    %4 = arith.cmpi eq, %3, %1 : vector<8x8x64xi32>
    %5 = arith.extui %4 : vector<8x8x64xi1> to vector<8x8x64xi32>
    %6 = arith.sitofp %5 : vector<8x8x64xi32> to vector<8x8x64xf32>
    %cst = arith.constant dense<0.000000e+00> : vector<8x64xf32>
    %7 = vector.multi_reduction <add>, %6, %cst [1] : vector<8x8x64xf32> to vector<8x64xf32>
    %cst_1 = arith.constant 1.250000e-01 : f32
    %8 = vector.broadcast %cst_1 : f32 to vector<8x64xf32>
    %9 = arith.mulf %7, %8 : vector<8x64xf32>
    %c0_2 = arith.constant 0 : index
    %c0_3 = arith.constant 0 : index
    %10 = vector.load %arg2[%c0_2, %c0_3] : memref<64x128xf32, #tpu.memory_space<vmem>>, vector<64x128xf32>
    %cst_4 = arith.constant dense<0.000000e+00> : vector<8x128xf32>
    %11 = tpu.matmul %9, %10, %cst_4 {dimension_numbers = #tpu.dot_dimension_numbers<[1], [0], [0], [1], [0, 0, 1, 1], [], []>} : vector<8x64xf32>, vector<64x128xf32>, vector<8x128xf32> -> vector<8x128xf32>
    %c0_5 = arith.constant 0 : index
    %c0_6 = arith.constant 0 : index
    %12 = vector.load %arg3[%c0_5, %c0_6] : memref<128x128xf32, #tpu.memory_space<vmem>>, vector<128x128xf32>
    %cst_7 = arith.constant dense<0.000000e+00> : vector<8x128xf32>
    %13 = tpu.matmul %11, %12, %cst_7 {dimension_numbers = #tpu.dot_dimension_numbers<[1], [0], [0], [1], [0, 0, 1, 1], [], []>} : vector<8x128xf32>, vector<128x128xf32>, vector<8x128xf32> -> vector<8x128xf32>
    %c0_8 = arith.constant 0 : index
    %c0_9 = arith.constant 0 : index
    %14 = vector.load %arg4[%c0_8, %c0_9] : memref<1x128xf32, #tpu.memory_space<vmem>>, vector<1x128xf32>
    %15 = vector.broadcast %14 : vector<1x128xf32> to vector<8x128xf32>
    %16 = arith.addf %13, %15 : vector<8x128xf32>
    %c0_10 = arith.constant 0 : index
    %c0_11 = arith.constant 0 : index
    %17 = vector.load %arg5[%c0_10, %c0_11] : memref<8x128xf32, #tpu.memory_space<vmem>>, vector<8x128xf32>
    tpu.vector_store %arg5[%c0_10, %c0_11], %16 {strides = array<i32>} : memref<8x128xf32, #tpu.memory_space<vmem>>, vector<8x128xf32>,
    return
  }
  func.func @transform_0(%arg0: i32) -> (i32, i32) {
    %c0_i32 = arith.constant 0 : i32
    %c0_i32_0 = arith.constant 0 : i32
    return %arg0, %c0_i32 : i32, i32
  }
  func.func @transform_1(%arg0: i32) -> (i32, i32) {
    %c0_i32 = arith.constant 0 : i32
    %c0_i32_0 = arith.constant 0 : i32
    %c0_i32_1 = arith.constant 0 : i32
    return %c0_i32, %c0_i32_0 : i32, i32
  }
  func.func @transform_2(%arg0: i32) -> (i32, i32) {
    %c0_i32 = arith.constant 0 : i32
    %c0_i32_0 = arith.constant 0 : i32
    %c0_i32_1 = arith.constant 0 : i32
    return %c0_i32, %c0_i32_0 : i32, i32
  }
  func.func @transform_3(%arg0: i32) -> (i32, i32) {
    %c0_i32 = arith.constant 0 : i32
    %c0_i32_0 = arith.constant 0 : i32
    %c0_i32_1 = arith.constant 0 : i32
    return %c0_i32, %c0_i32_0 : i32, i32
  }
  func.func @transform_4(%arg0: i32) -> (i32, i32) {
    %c0_i32 = arith.constant 0 : i32
    %c0_i32_0 = arith.constant 0 : i32
    return %arg0, %c0_i32 : i32, i32
  }
}

</mosaic_0001>

<llo_original>
// kernel: tpu_custom_call.1
$region0: #{tpu_custom_call.1}
  #allocation0 [shape = 'u32[]', space=smem, size = 0x4, offset = 0x4, fixed_abs, tag = 'smem constant byte address 0x4 - core index']
  #allocation1 [shape = 'u32[144,128]{1,0:T(1,128)}', space=vmem, size = 0x12000, scoped, tag = 'internal scratch']
  %s0 = inlined_call_operand.hbm [shape: s32[8,8], index: 0, kind: input, shape index: {}]
  %s1 = inlined_call_operand.hbm [shape: f32[64,128], index: 1, kind: input, shape index: {}]
  %s2 = inlined_call_operand.hbm [shape: f32[128,128], index: 2, kind: input, shape index: {}]
  %s3 = inlined_call_operand.hbm [shape: f32[1,128], index: 3, kind: input, shape index: {}]
  %s4 = inlined_call_operand.hbm [shape: f32[8,128], index: 4, kind: output, shape index: {}]
  %s5 = sld [smem:[#allocation0]]
  $region42: #{tpu_custom_call.1} parent=0
    _
  %s7 = ssub.s32 1, %s5
  %s8 = scalar_select 0, %s7, %s5
  $region1: #{tpu_custom_call.1} parent=0
    #allocation2 [shape = 'u8[4096]{0}', space=vmem, size = 0x1000, scoped, tag = 'input window, operand 0, single buffered']
    #allocation3 [shape = 's32[1]{0}', space=sflag, size = 0x4, scoped, tag = 'scoped memory for tpu_custom_call.1']
    #allocation4 [shape = 's32[1]{0}', space=sflag, size = 0x4, scoped, tag = 'scoped memory for tpu_custom_call.1']
    #allocation5 [shape = 'u8[32768]{0}', space=vmem, size = 0x8000, scoped, tag = 'input window, operand 1, single buffered']
    #allocation6 [shape = 's32[1]{0}', space=sflag, size = 0x4, scoped, tag = 'scoped memory for tpu_custom_call.1']
    #allocation7 [shape = 'u8[65536]{0}', space=vmem, size = 0x10000, scoped, tag = 'input window, operand 2, single buffered']
    #allocation8 [shape = 'u8[512]{0}', space=vmem, size = 0x400, scoped, tag = 'input window, operand 3, single buffered']
    #allocation9 [shape = 's32[1]{0}', space=sflag, size = 0x4, scoped, tag = 'scoped memory for tpu_custom_call.1']
    #allocation10 [shape = 'u8[4096]{0}', space=vmem, size = 0x1000, scoped, tag = 'output window, operand 0, single buffered']
    %9 = vsyncpa [#allocation3], 0
    %10 = vsyncpa [#allocation6], 0
    %11 = vsyncpa [#allocation9], 0
    %12 = vsyncpa [#allocation4], 0
    // Predicated region
    $region2: #{tpu_custom_call.1} parent=1 // pred_check
      _
    $region3: #{tpu_custom_call.1} parent=1 // pred_check_branch
      %14 = sbr.rel (0) target = $region5
    $region4: #{tpu_custom_call.1} parent=1 // pred_region
      %s16 = ssub.s32 128, 128
      %17 = vsyncadd [#allocation3], %s16
      %s19 = sshll.u32 [#allocation2], 4
      %s20 = int_to_ptr.vmem [resolvable:$true] %s19
      %22 = dma.hbm_to_vmem [thread:$0]  %s0, 128, %s20, [#allocation3]
    $region5: #{tpu_custom_call.1} parent=1 // pred_fallthru
      _
    // Predicated region
    $region6: #{tpu_custom_call.1} parent=1 // pred_check
      _
    $region7: #{tpu_custom_call.1} parent=1 // pred_check_branch
      %24 = sbr.rel (0) target = $region9
    $region8: #{tpu_custom_call.1} parent=1 // pred_region
      %s26 = ssub.s32 1024, 1024
      %27 = vsyncadd [#allocation6], %s26
      %s28 = sshll.u32 [#allocation5], 4
      %s29 = int_to_ptr.vmem [resolvable:$true] %s28
      %34 = dma.hbm_to_vmem [thread:$0]  %s1, 1024, %s29, [#allocation6], 128, 128, 8
    $region9: #{tpu_custom_call.1} parent=1 // pred_fallthru
      _
    // Predicated region
    $region10: #{tpu_custom_call.1} parent=1 // pred_check
      _
    $region11: #{tpu_custom_call.1} parent=1 // pred_check_branch
      %36 = sbr.rel (0) target = $region13
    $region12: #{tpu_custom_call.1} parent=1 // pred_region
      %s38 = ssub.s32 2048, 2048
      %39 = vsyncadd [#allocation6], %s38
      %s40 = sshll.u32 [#allocation7], 4
      %s41 = int_to_ptr.vmem [resolvable:$true] %s40
      %46 = dma.hbm_to_vmem [thread:$0]  %s2, 2048, %s41, [#allocation6], 128, 128, 8
    $region13: #{tpu_custom_call.1} parent=1 // pred_fallthru
      _
    // Predicated region
    $region14: #{tpu_custom_call.1} parent=1 // pred_check
      _
    $region15: #{tpu_custom_call.1} parent=1 // pred_check_branch
      %48 = sbr.rel (0) target = $region17
    $region16: #{tpu_custom_call.1} parent=1 // pred_region
      %s50 = ssub.s32 16, 16
      %51 = vsyncadd [#allocation9], %s50
      %s53 = sshll.u32 [#allocation8], 4
      %s54 = int_to_ptr.vmem [resolvable:$true] %s53
      %56 = dma.hbm_to_vmem [thread:$0]  %s3, 16, %s54, [#allocation9]
    $region17: #{tpu_custom_call.1} parent=1 // pred_fallthru
      _
    // Predicated region
    $region18: #{tpu_custom_call.1} parent=1 // pred_check
      _
    $region19: #{tpu_custom_call.1} parent=1 // pred_check_branch
      %58 = sbr.rel (0) target = $region21
    $region20: #{tpu_custom_call.1} parent=1 // pred_region
      %59 = dma.done [#allocation3], 128
    $region21: #{tpu_custom_call.1} parent=1 // pred_fallthru
      _
    // Predicated region
    $region22: #{tpu_custom_call.1} parent=1 // pred_check
      _
    $region23: #{tpu_custom_call.1} parent=1 // pred_check_branch
      %61 = sbr.rel (0) target = $region25
    $region24: #{tpu_custom_call.1} parent=1 // pred_region
      %62 = dma.done [#allocation6], 1024
    $region25: #{tpu_custom_call.1} parent=1 // pred_fallthru
      _
    // Predicated region
    $region26: #{tpu_custom_call.1} parent=1 // pred_check
      _
    $region27: #{tpu_custom_call.1} parent=1 // pred_check_branch
      %64 = sbr.rel (0) target = $region29
    $region28: #{tpu_custom_call.1} parent=1 // pred_region
      %65 = dma.done [#allocation6], 2048
    $region29: #{tpu_custom_call.1} parent=1 // pred_fallthru
      _
    // Predicated region
    $region30: #{tpu_custom_call.1} parent=1 // pred_check
      _
    $region31: #{tpu_custom_call.1} parent=1 // pred_check_branch
      %67 = sbr.rel (0) target = $region33
    $region32: #{tpu_custom_call.1} parent=1 // pred_region
      %68 = dma.done [#allocation9], 16
    $region33: #{tpu_custom_call.1} parent=1 // pred_fallthru
      _
    %v69 = vld [vmem:[#allocation2] sm:$0xff]
    %v70 = vlaneseq
    %v71 = vand.u32 %v70, 127
    %v72 = vlaneseq
    %v73 = vshrl.u32 %v72, 7
    %v74 = vsub.s32 0, %v73
    %v75 = vrot.slane %v69, %v74
    %77 = vbcast.lane.b32.xlu0 %v75, 256
    %v78 = vpop.permute.xlu0 %77
    %v79 = vlaneseq
    %v80 = vshrl.u32 %v79, 7
    %v81 = vsub.s32 1, %v80
    %v82 = vrot.slane %v69, %v81
    %84 = vbcast.lane.b32.xlu0 %v82, 256
    %v85 = vpop.permute.xlu0 %84
    %v86 = vlaneseq
    %v87 = vshrl.u32 %v86, 7
    %v88 = vsub.s32 2, %v87
    %v89 = vrot.slane %v69, %v88
    %91 = vbcast.lane.b32.xlu0 %v89, 256
    %v92 = vpop.permute.xlu0 %91
    %v93 = vlaneseq
    %v94 = vshrl.u32 %v93, 7
    %v95 = vsub.s32 3, %v94
    %v96 = vrot.slane %v69, %v95
    %98 = vbcast.lane.b32.xlu0 %v96, 256
    %v99 = vpop.permute.xlu0 %98
    %v100 = vlaneseq
    %v101 = vshrl.u32 %v100, 7
    %v102 = vsub.s32 4, %v101
    %v103 = vrot.slane %v69, %v102
    %105 = vbcast.lane.b32.xlu0 %v103, 256
    %v106 = vpop.permute.xlu0 %105
    %v107 = vlaneseq
    %v108 = vshrl.u32 %v107, 7
    %v109 = vsub.s32 5, %v108
    %v110 = vrot.slane %v69, %v109
    %112 = vbcast.lane.b32.xlu0 %v110, 256
    %v113 = vpop.permute.xlu0 %112
    %v114 = vlaneseq
    %v115 = vshrl.u32 %v114, 7
    %v116 = vsub.s32 6, %v115
    %v117 = vrot.slane %v69, %v116
    %119 = vbcast.lane.b32.xlu0 %v117, 256
    %v120 = vpop.permute.xlu0 %119
    %v121 = vlaneseq
    %v122 = vshrl.u32 %v121, 7
    %v123 = vsub.s32 7, %v122
    %v124 = vrot.slane %v69, %v123
    %126 = vbcast.lane.b32.xlu0 %v124, 256
    %v127 = vpop.permute.xlu0 %126
    %vm128 = vcmp.eq.s32.totalorder %v78, %v71
    %vm129 = vcmp.eq.s32.totalorder %v85, %v71
    %vm130 = vcmp.eq.s32.totalorder %v92, %v71
    %vm131 = vcmp.eq.s32.totalorder %v99, %v71
    %vm132 = vcmp.eq.s32.totalorder %v106, %v71
    %vm133 = vcmp.eq.s32.totalorder %v113, %v71
    %vm134 = vcmp.eq.s32.totalorder %v120, %v71
    %vm135 = vcmp.eq.s32.totalorder %v127, %v71
    %v136 = vsel %vm128, 1, 0
    %v137 = vsel %vm129, 1, 0
    %v138 = vsel %vm130, 1, 0
    %v139 = vsel %vm131, 1, 0
    %v140 = vsel %vm132, 1, 0
    %v141 = vsel %vm133, 1, 0
    %v142 = vsel %vm134, 1, 0
    %v143 = vsel %vm135, 1, 0
    %v144 = vcvt.s32.f32 %v136
    %v145 = vcvt.s32.f32 %v137
    %v146 = vcvt.s32.f32 %v138
    %v147 = vcvt.s32.f32 %v139
    %v148 = vcvt.s32.f32 %v140
    %v149 = vcvt.s32.f32 %v141
    %v150 = vcvt.s32.f32 %v142
    %v151 = vcvt.s32.f32 %v143
    %vm152 = vcmask 523264
    %v153 = vsel %vm152, %v144, 0.0
    %v154 = vrot.slane %v153, 4
    %v155 = vadd.f32 %v153, %v154
    %v156 = vrot.slane %v155, 2
    %v157 = vadd.f32 %v155, %v156
    %v158 = vrot.slane %v157, 1
    %v159 = vadd.f32 %v157, %v158
    %v160 = vsel %vm152, %v145, 0.0
    %v161 = vrot.slane %v160, 4
    %v162 = vadd.f32 %v160, %v161
    %v163 = vrot.slane %v162, 2
    %v164 = vadd.f32 %v162, %v163
    %v165 = vrot.slane %v164, 1
    %v166 = vadd.f32 %v164, %v165
    %v167 = vsel %vm152, %v146, 0.0
    %v168 = vrot.slane %v167, 4
    %v169 = vadd.f32 %v167, %v168
    %v170 = vrot.slane %v169, 2
    %v171 = vadd.f32 %v169, %v170
    %v172 = vrot.slane %v171, 1
    %v173 = vadd.f32 %v171, %v172
    %v174 = vsel %vm152, %v147, 0.0
    %v175 = vrot.slane %v174, 4
    %v176 = vadd.f32 %v174, %v175
    %v177 = vrot.slane %v176, 2
    %v178 = vadd.f32 %v176, %v177
    %v179 = vrot.slane %v178, 1
    %v180 = vadd.f32 %v178, %v179
    %v181 = vsel %vm152, %v148, 0.0
    %v182 = vrot.slane %v181, 4
    %v183 = vadd.f32 %v181, %v182
    %v184 = vrot.slane %v183, 2
    %v185 = vadd.f32 %v183, %v184
    %v186 = vrot.slane %v185, 1
    %v187 = vadd.f32 %v185, %v186
    %v188 = vsel %vm152, %v149, 0.0
    %v189 = vrot.slane %v188, 4
    %v190 = vadd.f32 %v188, %v189
    %v191 = vrot.slane %v190, 2
    %v192 = vadd.f32 %v190, %v191
    %v193 = vrot.slane %v192, 1
    %v194 = vadd.f32 %v192, %v193
    %v195 = vsel %vm152, %v150, 0.0
    %v196 = vrot.slane %v195, 4
    %v197 = vadd.f32 %v195, %v196
    %v198 = vrot.slane %v197, 2
    %v199 = vadd.f32 %v197, %v198
    %v200 = vrot.slane %v199, 1
    %v201 = vadd.f32 %v199, %v200
    %v202 = vsel %vm152, %v151, 0.0
    %v203 = vrot.slane %v202, 4
    %v204 = vadd.f32 %v202, %v203
    %v205 = vrot.slane %v204, 2
    %v206 = vadd.f32 %v204, %v205
    %v207 = vrot.slane %v206, 1
    %v208 = vadd.f32 %v206, %v207
    %v209 = vmul.f32 %v159, 0.125
    %v210 = vmul.f32 %v166, 0.125
    %v211 = vmul.f32 %v173, 0.125
    %v212 = vmul.f32 %v180, 0.125
    %v213 = vmul.f32 %v187, 0.125
    %v214 = vmul.f32 %v194, 0.125
    %v215 = vmul.f32 %v201, 0.125
    %v216 = vmul.f32 %v208, 0.125
    %v217 = vld [vmem:[#allocation5] sm:$0xff]
    %v218 = vld [vmem:[#allocation5 + $0x8] sm:$0xff]
    %v219 = vld [vmem:[#allocation5 + $0x10] sm:$0xff]
    %v220 = vld [vmem:[#allocation5 + $0x18] sm:$0xff]
    %v221 = vld [vmem:[#allocation5 + $0x20] sm:$0xff]
    %v222 = vld [vmem:[#allocation5 + $0x28] sm:$0xff]
    %v223 = vld [vmem:[#allocation5 + $0x30] sm:$0xff]
    %v224 = vld [vmem:[#allocation5 + $0x38] sm:$0xff]
    %vm233 = vcmask 1041409
    %v234 = vsel %vm233, %v210, %v209
    %vm235 = vcmask 1042434
    %v236 = vsel %vm235, %v211, %v234
    %vm237 = vcmask 1043459
    %v238 = vsel %vm237, %v212, %v236
    %vm239 = vcmask 1044484
    %v240 = vsel %vm239, %v213, %v238
    %vm241 = vcmask 1045509
    %v242 = vsel %vm241, %v214, %v240
    %vm243 = vcmask 1046534
    %v244 = vsel %vm243, %v215, %v242
    %vm245 = vcmask 1047559
    %v246 = vsel %vm245, %v216, %v244
    %v247 = vsel %vm152, %v246, 0
    %249 = vmatprep.subr.mxu0 0.0
    %250 = vmatpush1.msra.mxu0 %v217
    %251 = vmatprep.subr.mxu0 0.0
    %252 = vmatpush1.msra.mxu0 %v218
    %253 = vmatprep.subr.mxu0 0.0
    %254 = vmatpush1.msra.mxu0 %v219
    %255 = vmatprep.subr.mxu0 0.0
    %256 = vmatpush1.msra.mxu0 %v220
    %257 = vmatprep.subr.mxu0 0.0
    %258 = vmatpush1.msra.mxu0 %v221
    %259 = vmatprep.subr.mxu0 0.0
    %260 = vmatpush1.msra.mxu0 %v222
    %261 = vmatprep.subr.mxu0 0.0
    %262 = vmatpush1.msra.mxu0 %v223
    %263 = vmatprep.subr.mxu0 0.0
    %264 = vmatpush1.msra.mxu0 %v224
    %265 = vmatprep.subr.mxu0 0.0
    %266 = vmatpush1.msra.mxu0 0.0
    %267 = vmatprep.subr.mxu0 0.0
    %268 = vmatpush1.msra.mxu0 0.0
    %269 = vmatprep.subr.mxu0 0.0
    %270 = vmatpush1.msra.mxu0 0.0
    %271 = vmatprep.subr.mxu0 0.0
    %272 = vmatpush1.msra.mxu0 0.0
    %273 = vmatprep.subr.mxu0 0.0
    %274 = vmatpush1.msra.mxu0 0.0
    %275 = vmatprep.subr.mxu0 0.0
    %276 = vmatpush1.msra.mxu0 0.0
    %277 = vmatprep.subr.mxu0 0.0
    %278 = vmatpush1.msra.mxu0 0.0
    %279 = vmatprep.subr.mxu0 0.0
    %280 = vmatpush1.msra.mxu0 0.0
    %281 = vmatprep.subr.mxu0 0.0
    %282 = vmatpush1.msra.mxu0 0.0
    %283 = vmatprep.subr.mxu0 0.0
    %284 = vmatpush1.msra.mxu0 0.0
    %285 = vmatprep.subr.mxu0 0.0
    %286 = vmatpush1.msra.mxu0 0.0
    %287 = vmatprep.subr.mxu0 0.0
    %288 = vmatpush1.msra.mxu0 0.0
    %289 = vmatprep.subr.mxu0 0.0
    %290 = vmatpush1.msra.mxu0 0.0
    %291 = vmatprep.subr.mxu0 0.0
    %292 = vmatpush1.msra.mxu0 0.0
    %293 = vmatprep.subr.mxu0 0.0
    %294 = vmatpush1.msra.mxu0 0.0
    %295 = vmatprep.subr.mxu0 0.0
    %296 = vmatpush1.msra.mxu0 0.0
    %297 = vmatprep.subr.mxu0 0.0
    %298 = vmatpush1.msra.mxu0 0.0
    %299 = vmatprep.subr.mxu0 0.0
    %300 = vmatpush1.msra.mxu0 0.0
    %301 = vmatprep.subr.mxu0 0.0
    %302 = vmatpush1.msra.mxu0 0.0
    %303 = vmatprep.subr.mxu0 0.0
    %304 = vmatpush1.msra.mxu0 0.0
    %305 = vmatprep.subr.mxu0 0.0
    %306 = vmatpush1.msra.mxu0 0.0
    %307 = vmatprep.subr.mxu0 0.0
    %308 = vmatpush1.msra.mxu0 0.0
    %309 = vmatprep.subr.mxu0 0.0
    %310 = vmatpush1.msra.mxu0 0.0
    %311 = vmatprep.subr.mxu0 0.0
    %312 = vmatpush1.msra.mxu0 0.0
    %313 = vmatprep.mubr.f32.mxu0 0.0
    %314 = vmatmul.mubr.f32.gmra.mrb[0].mxu0 %v247
    %v315 = vpop.f32.mrb[0].mxu0
    %v316 = vadd.f32 0.0, %v315
    %v317 = vpop.f32.mrb[0].mxu0
    %318 = vdwg.mxu0
    %v319 = vld [vmem:[#allocation7] sm:$0xff]
    %v320 = vld [vmem:[#allocation7 + $0x8] sm:$0xff]
    %v321 = vld [vmem:[#allocation7 + $0x10] sm:$0xff]
    %v322 = vld [vmem:[#allocation7 + $0x18] sm:$0xff]
    %v323 = vld [vmem:[#allocation7 + $0x20] sm:$0xff]
    %v324 = vld [vmem:[#allocation7 + $0x28] sm:$0xff]
    %v325 = vld [vmem:[#allocation7 + $0x30] sm:$0xff]
    %v326 = vld [vmem:[#allocation7 + $0x38] sm:$0xff]
    %v327 = vld [vmem:[#allocation7 + $0x40] sm:$0xff]
    %v328 = vld [vmem:[#allocation7 + $0x48] sm:$0xff]
    %v329 = vld [vmem:[#allocation7 + $0x50] sm:$0xff]
    %v330 = vld [vmem:[#allocation7 + $0x58] sm:$0xff]
    %v331 = vld [vmem:[#allocation7 + $0x60] sm:$0xff]
    %v332 = vld [vmem:[#allocation7 + $0x68] sm:$0xff]
    %v333 = vld [vmem:[#allocation7 + $0x70] sm:$0xff]
    %v334 = vld [vmem:[#allocation7 + $0x78] sm:$0xff]
    %v335 = vld [vmem:[#allocation8] sm:$0x1]
    %v337 = vlaneseq
    %v338 = vshrl.u32 %v337, 7
    %v339 = vsub.s32 0, %v338
    %v340 = vrot.slane %v335, %v339
    %342 = vmatprep.subr.mxu0 0.0
    %343 = vmatpush1.msra.mxu0 %v319
    %344 = vmatprep.subr.mxu0 0.0
    %345 = vmatpush1.msra.mxu0 %v320
    %346 = vmatprep.subr.mxu0 0.0
    %347 = vmatpush1.msra.mxu0 %v321
    %348 = vmatprep.subr.mxu0 0.0
    %349 = vmatpush1.msra.mxu0 %v322
    %350 = vmatprep.subr.mxu0 0.0
    %351 = vmatpush1.msra.mxu0 %v323
    %352 = vmatprep.subr.mxu0 0.0
    %353 = vmatpush1.msra.mxu0 %v324
    %354 = vmatprep.subr.mxu0 0.0
    %355 = vmatpush1.msra.mxu0 %v325
    %356 = vmatprep.subr.mxu0 0.0
    %357 = vmatpush1.msra.mxu0 %v326
    %358 = vmatprep.subr.mxu0 0.0
    %359 = vmatpush1.msra.mxu0 %v327
    %360 = vmatprep.subr.mxu0 0.0
    %361 = vmatpush1.msra.mxu0 %v328
    %362 = vmatprep.subr.mxu0 0.0
    %363 = vmatpush1.msra.mxu0 %v329
    %364 = vmatprep.subr.mxu0 0.0
    %365 = vmatpush1.msra.mxu0 %v330
    %366 = vmatprep.subr.mxu0 0.0
    %367 = vmatpush1.msra.mxu0 %v331
    %368 = vmatprep.subr.mxu0 0.0
    %369 = vmatpush1.msra.mxu0 %v332
    %370 = vmatprep.subr.mxu0 0.0
    %371 = vmatpush1.msra.mxu0 %v333
    %372 = vmatprep.subr.mxu0 0.0
    %373 = vmatpush1.msra.mxu0 %v334
    %374 = vmatprep.subr.mxu0 0.0
    %375 = vmatpush1.msra.mxu0 0.0
    %376 = vmatprep.subr.mxu0 0.0
    %377 = vmatpush1.msra.mxu0 0.0
    %378 = vmatprep.subr.mxu0 0.0
    %379 = vmatpush1.msra.mxu0 0.0
    %380 = vmatprep.subr.mxu0 0.0
    %381 = vmatpush1.msra.mxu0 0.0
    %382 = vmatprep.subr.mxu0 0.0
    %383 = vmatpush1.msra.mxu0 0.0
    %384 = vmatprep.subr.mxu0 0.0
    %385 = vmatpush1.msra.mxu0 0.0
    %386 = vmatprep.subr.mxu0 0.0
    %387 = vmatpush1.msra.mxu0 0.0
    %388 = vmatprep.subr.mxu0 0.0
    %389 = vmatpush1.msra.mxu0 0.0
    %390 = vmatprep.subr.mxu0 0.0
    %391 = vmatpush1.msra.mxu0 0.0
    %392 = vmatprep.subr.mxu0 0.0
    %393 = vmatpush1.msra.mxu0 0.0
    %394 = vmatprep.subr.mxu0 0.0
    %395 = vmatpush1.msra.mxu0 0.0
    %396 = vmatprep.subr.mxu0 0.0
    %397 = vmatpush1.msra.mxu0 0.0
    %398 = vmatprep.subr.mxu0 0.0
    %399 = vmatpush1.msra.mxu0 0.0
    %400 = vmatprep.subr.mxu0 0.0
    %401 = vmatpush1.msra.mxu0 0.0
    %402 = vmatprep.subr.mxu0 0.0
    %403 = vmatpush1.msra.mxu0 0.0
    %404 = vmatprep.subr.mxu0 0.0
    %405 = vmatpush1.msra.mxu0 0.0
    %406 = vmatprep.mubr.f32.mxu0 0.0
    %407 = vmatmul.mubr.f32.gmra.mrb[0].mxu0 %v316
    %v408 = vpop.f32.mrb[0].mxu0
    %v409 = vadd.f32 %v340, %v408
    %v410 = vpop.f32.mrb[0].mxu0
    %411 = vdwg.mxu0
    %412 = vst [vmem:[#allocation10] sm:$0xff] %v409
    // Predicated region
    $region34: #{tpu_custom_call.1} parent=1 // pred_check
      _
    $region35: #{tpu_custom_call.1} parent=1 // pred_check_branch
      %414 = sbr.rel (0) target = $region37
    $region36: #{tpu_custom_call.1} parent=1 // pred_region
      %s416 = ssub.s32 128, 128
      %417 = vsyncadd [#allocation4], %s416
      %s419 = sshll.u32 [#allocation10], 4
      %s420 = int_to_ptr.vmem [resolvable:$true] %s419
      %422 = dma.vmem_to_hbm [thread:$0]  %s420, 128, %s4, [#allocation4]
    $region37: #{tpu_custom_call.1} parent=1 // pred_fallthru
      _
    // Predicated region
    $region38: #{tpu_custom_call.1} parent=1 // pred_check
      _
    $region39: #{tpu_custom_call.1} parent=1 // pred_check_branch
      %424 = sbr.rel (0) target = $region41
    $region40: #{tpu_custom_call.1} parent=1 // pred_region
      %425 = dma.done [#allocation4], 128
    $region41: #{tpu_custom_call.1} parent=1 // pred_fallthru
      _
    %426 = vsyncpa [#allocation3], 1
    %427 = vsyncpa [#allocation6], 1
    %428 = vsyncpa [#allocation9], 1
    %429 = vsyncpa [#allocation4], 1

</llo_original>
